<compile_context>
chip_gen: v7x
topology: tpu7x:2x2x1
jax: 0.10.0
libtpu: 0.0.40
codegen_flags: <defaults>
</compile_context>

<pallas_src>
import functools

import jax
import jax.numpy as jnp
from jax.experimental import pallas as pl
from jax.experimental.pallas import tpu as pltpu

_LANES = 128


def _round_up(x, m):
    return ((x + m - 1) // m) * m


def _rmsle_partial_kernel(pred_ref, act_ref, out_ref, *, tm, valid_rows):
    """One grid step: per-lane partial sum of squared log-diffs for one tile.

    pred_ref / act_ref : VMEM tiles (tm, 128), any float dtype
    out_ref            : VMEM (8, 128) f32 per-block partial sums
    """
    p = pred_ref[...].astype(jnp.float32)
    a = act_ref[...].astype(jnp.float32)

    # log(p+1) - log(a+1) == log((p+1)/(a+1)): one EUP log instead of two.
    d = jnp.log((p + 1.0) / (a + 1.0))
    dd = d * d

    if valid_rows % tm != 0:
        # Ragged row tail: rows past the array end hold garbage -> mask to 0.
        row = pl.program_id(0) * tm + jax.lax.broadcasted_iota(
            jnp.int32, dd.shape, 0
        )
        dd = jnp.where(row < valid_rows, dd, 0.0)

    # (tm, 128) -> (tm//8, 8, 128) sum over axis 0: pure VPU vreg adds,
    # lane/sublane-aligned (8, 128) output block.
    out_ref[...] = jnp.sum(dd.reshape(tm // 8, 8, _LANES), axis=0)


def rmsle_loss(pred, actual, *, tile_rows=1024):
    """RMSLE = sqrt(mean((log(pred+1) - log(actual+1))^2)) over all elements."""
    assert pred.shape == actual.shape, "pred/actual must have identical shapes"
    total = pred.size
    assert total > 0

    # Flatten to a lane-dense [rows, 128] slab; zero-pad the lane tail
    # (zeros contribute log(1)-log(1) = 0 to the sum).
    rows = pl.cdiv(total, _LANES)
    padded = rows * _LANES
    p_flat = jnp.ravel(pred)
    a_flat = jnp.ravel(actual)
    if padded != total:
        p_flat = jnp.pad(p_flat, (0, padded - total))
        a_flat = jnp.pad(a_flat, (0, padded - total))
    p2 = p_flat.reshape(rows, _LANES)
    a2 = a_flat.reshape(rows, _LANES)

    # Tile size: as large as possible up to tile_rows (multiple of 8).
    # 2 inputs x 2 pipeline buffers x tm*128*4B must stay well under the
    # scoped-VMEM budget (16 MiB on v5e): tile_rows<=4096 is always safe.
    tm = min(_round_up(tile_rows, 8), _round_up(rows, 8))
    grid_n = pl.cdiv(rows, tm)

    kernel = functools.partial(_rmsle_partial_kernel, tm=tm, valid_rows=rows)

    partials = pl.pallas_call(
        kernel,
        out_shape=jax.ShapeDtypeStruct((grid_n * 8, _LANES), jnp.float32),
        grid_spec=pltpu.PrefetchScalarGridSpec(
            num_scalar_prefetch=0,
            grid=(grid_n,),
            in_specs=[
                pl.BlockSpec((tm, _LANES), lambda i: (i, 0)),
                pl.BlockSpec((tm, _LANES), lambda i: (i, 0)),
            ],
            out_specs=pl.BlockSpec((8, _LANES), lambda i: (i, 0)),
        ),
        compiler_params=pltpu.CompilerParams(
            # Independent per-block partial sums -> megacore-shardable on v7x.
            dimension_semantics=("parallel",),
        ),
    )(p2, a2)

    # Tiny final reduce + mean + sqrt in the wrapper.
    return jnp.sqrt(jnp.sum(partials, dtype=jnp.float32) / jnp.float32(total))


def rmsle_loss_ref(pred, actual):
    d = jnp.log(pred.astype(jnp.float32) + 1.0) - jnp.log(
        actual.astype(jnp.float32) + 1.0
    )
    return jnp.sqrt(jnp.mean(d * d))


if __name__ == "__main__":
    key = jax.random.PRNGKey(0)
    k1, k2 = jax.random.split(key)

    # Small NCHW inputs; positive values (valid domain for log(x+1)).
    shape = (2, 4, 16, 16)  # 2048 elems = 16 rows x 128 lanes
    pred = jax.random.uniform(k1, shape, dtype=jnp.float32, minval=0.0, maxval=2.0)
    actual = jax.random.uniform(k2, shape, dtype=jnp.float32, minval=0.0, maxval=2.0)

    loss = rmsle_loss(pred, actual)
    loss = jax.block_until_ready(loss)

    ref = rmsle_loss_ref(pred, actual)
    assert jnp.allclose(loss, ref, rtol=1e-5, atol=1e-6), (loss, ref)

    print("KERNEL_OK")
</pallas_src>

<mosaic_0001>
module attributes {stable_mosaic.version = 11 : i64} {
  func.func @_rmsle_partial_kernel(%arg0: i32, %arg1: memref<16x128xf32, #tpu.memory_space<vmem>>, %arg2: memref<16x128xf32, #tpu.memory_space<vmem>>, %arg3: memref<8x128xf32, #tpu.memory_space<vmem>>) attributes {dimension_semantics = [#tpu.dimension_semantics<parallel>], iteration_bounds = array<i64: 1>, scalar_prefetch = 0 : i64, scratch_operands = 0 : i64, tpu.core_type = #tpu.core_type<tc>, window_params = [{transform_indices = @transform_0, window_bounds = array<i64: 16, 128>}, {transform_indices = @transform_1, window_bounds = array<i64: 16, 128>}, {transform_indices = @transform_2, window_bounds = array<i64: 8, 128>}]} {
    %c0 = arith.constant 0 : index
    %c0_0 = arith.constant 0 : index
    %0 = vector.load %arg1[%c0, %c0_0] : memref<16x128xf32, #tpu.memory_space<vmem>>, vector<16x128xf32>
    %c0_1 = arith.constant 0 : index
    %c0_2 = arith.constant 0 : index
    %1 = vector.load %arg2[%c0_1, %c0_2] : memref<16x128xf32, #tpu.memory_space<vmem>>, vector<16x128xf32>
    %cst = arith.constant 1.000000e+00 : f32
    %2 = vector.broadcast %cst : f32 to vector<16x128xf32>
    %3 = arith.addf %0, %2 : vector<16x128xf32>
    %cst_3 = arith.constant 1.000000e+00 : f32
    %4 = vector.broadcast %cst_3 : f32 to vector<16x128xf32>
    %5 = arith.addf %1, %4 : vector<16x128xf32>
    %6 = arith.divf %3, %5 : vector<16x128xf32>
    %7 = math.log %6 : vector<16x128xf32>
    %8 = arith.mulf %7, %7 : vector<16x128xf32>
    %9 = vector.shape_cast %8 : vector<16x128xf32> to vector<2x8x128xf32>
    %cst_4 = arith.constant dense<0.000000e+00> : vector<8x128xf32>
    %10 = vector.multi_reduction <add>, %9, %cst_4 [0] : vector<2x8x128xf32> to vector<8x128xf32>
    %c0_5 = arith.constant 0 : index
    %c0_6 = arith.constant 0 : index
    %11 = vector.load %arg3[%c0_5, %c0_6] : memref<8x128xf32, #tpu.memory_space<vmem>>, vector<8x128xf32>
    tpu.vector_store %arg3[%c0_5, %c0_6], %10 {strides = array<i32>} : memref<8x128xf32, #tpu.memory_space<vmem>>, vector<8x128xf32>,
    return
  }
  func.func @transform_0(%arg0: i32) -> (i32, i32) {
    %c0_i32 = arith.constant 0 : i32
    %c0_i32_0 = arith.constant 0 : i32
    return %arg0, %c0_i32 : i32, i32
  }
  func.func @transform_1(%arg0: i32) -> (i32, i32) {
    %c0_i32 = arith.constant 0 : i32
    %c0_i32_0 = arith.constant 0 : i32
    return %arg0, %c0_i32 : i32, i32
  }
  func.func @transform_2(%arg0: i32) -> (i32, i32) {
    %c0_i32 = arith.constant 0 : i32
    %c0_i32_0 = arith.constant 0 : i32
    return %arg0, %c0_i32 : i32, i32
  }
}

</mosaic_0001>

<llo_original>
// kernel: tpu_custom_call.1
$region0: #{tpu_custom_call.1}
  #allocation0 [shape = 'u32[]', space=smem, size = 0x4, offset = 0x4, fixed_abs, tag = 'smem constant byte address 0x4 - core index']
  #allocation1 [shape = 'u32[144,128]{1,0:T(1,128)}', space=vmem, size = 0x12000, scoped, tag = 'internal scratch']
  %s0 = inlined_call_operand.hbm [shape: f32[16,128], index: 0, kind: input, shape index: {}]
  %s1 = inlined_call_operand.hbm [shape: f32[16,128], index: 1, kind: input, shape index: {}]
  %s2 = inlined_call_operand.hbm [shape: f32[8,128], index: 2, kind: output, shape index: {}]
  %s3 = sld [smem:[#allocation0]]
  $region26: #{tpu_custom_call.1} parent=0
    _
  %s5 = ssub.s32 1, %s3
  %s6 = scalar_select 0, %s5, %s3
  $region1: #{tpu_custom_call.1} parent=0
    #allocation2 [shape = 'u8[8192]{0}', space=vmem, size = 0x2000, scoped, tag = 'input window, operand 0, single buffered']
    #allocation3 [shape = 's32[1]{0}', space=sflag, size = 0x4, scoped, tag = 'scoped memory for tpu_custom_call.1']
    #allocation4 [shape = 's32[1]{0}', space=sflag, size = 0x4, scoped, tag = 'scoped memory for tpu_custom_call.1']
    #allocation5 [shape = 'u8[8192]{0}', space=vmem, size = 0x2000, scoped, tag = 'input window, operand 1, single buffered']
    #allocation6 [shape = 's32[1]{0}', space=sflag, size = 0x4, scoped, tag = 'scoped memory for tpu_custom_call.1']
    #allocation7 [shape = 'u8[4096]{0}', space=vmem, size = 0x1000, scoped, tag = 'output window, operand 0, single buffered']
    %7 = vsyncpa [#allocation3], 0
    %8 = vsyncpa [#allocation6], 0
    %9 = vsyncpa [#allocation4], 0
    // Predicated region
    $region2: #{tpu_custom_call.1} parent=1 // pred_check
      _
    $region3: #{tpu_custom_call.1} parent=1 // pred_check_branch
      %11 = sbr.rel (0) target = $region5
    $region4: #{tpu_custom_call.1} parent=1 // pred_region
      %s13 = ssub.s32 256, 256
      %14 = vsyncadd [#allocation3], %s13
      %s15 = sshll.u32 [#allocation2], 4
      %s16 = int_to_ptr.vmem [resolvable:$true] %s15
      %21 = dma.hbm_to_vmem [thread:$0]  %s0, 256, %s16, [#allocation3], 128, 128, 8
    $region5: #{tpu_custom_call.1} parent=1 // pred_fallthru
      _
    // Predicated region
    $region6: #{tpu_custom_call.1} parent=1 // pred_check
      _
    $region7: #{tpu_custom_call.1} parent=1 // pred_check_branch
      %23 = sbr.rel (0) target = $region9
    $region8: #{tpu_custom_call.1} parent=1 // pred_region
      %s25 = ssub.s32 256, 256
      %26 = vsyncadd [#allocation6], %s25
      %s27 = sshll.u32 [#allocation5], 4
      %s28 = int_to_ptr.vmem [resolvable:$true] %s27
      %33 = dma.hbm_to_vmem [thread:$0]  %s1, 256, %s28, [#allocation6], 128, 128, 8
    $region9: #{tpu_custom_call.1} parent=1 // pred_fallthru
      _
    // Predicated region
    $region10: #{tpu_custom_call.1} parent=1 // pred_check
      _
    $region11: #{tpu_custom_call.1} parent=1 // pred_check_branch
      %35 = sbr.rel (0) target = $region13
    $region12: #{tpu_custom_call.1} parent=1 // pred_region
      %36 = dma.done [#allocation3], 256
    $region13: #{tpu_custom_call.1} parent=1 // pred_fallthru
      _
    // Predicated region
    $region14: #{tpu_custom_call.1} parent=1 // pred_check
      _
    $region15: #{tpu_custom_call.1} parent=1 // pred_check_branch
      %38 = sbr.rel (0) target = $region17
    $region16: #{tpu_custom_call.1} parent=1 // pred_region
      %39 = dma.done [#allocation6], 256
    $region17: #{tpu_custom_call.1} parent=1 // pred_fallthru
      _
    %v40 = vld [vmem:[#allocation2] sm:$0xff]
    %v41 = vld [vmem:[#allocation2 + $0x8] sm:$0xff]
    %v42 = vld [vmem:[#allocation5] sm:$0xff]
    %v43 = vld [vmem:[#allocation5 + $0x8] sm:$0xff]
    %v44 = vadd.f32 %v40, 1.0
    %v45 = vadd.f32 %v41, 1.0
    %v46 = vadd.f32 %v42, 1.0
    %v47 = vadd.f32 %v43, 1.0
    %v48 = vrcp.pop %v46
    %v49 = vmul.f32 %v44, %v48
    %v50 = vrcp.pop %v47
    %v51 = vmul.f32 %v45, %v50
    %v52 = vlog2.pop %v49
    %v53 = vmul.f32 %v52, 0.6931472
    %v54 = vlog2.pop %v51
    %v55 = vmul.f32 %v54, 0.6931472
    %v56 = vmul.f32 %v53, %v53
    %v57 = vmul.f32 %v55, %v55
    %v58 = vadd.f32 %v56, %v57
    %59 = vst [vmem:[#allocation7] sm:$0xff] %v58
    // Predicated region
    $region18: #{tpu_custom_call.1} parent=1 // pred_check
      _
    $region19: #{tpu_custom_call.1} parent=1 // pred_check_branch
      %61 = sbr.rel (0) target = $region21
    $region20: #{tpu_custom_call.1} parent=1 // pred_region
      %s63 = ssub.s32 128, 128
      %64 = vsyncadd [#allocation4], %s63
      %s66 = sshll.u32 [#allocation7], 4
      %s67 = int_to_ptr.vmem [resolvable:$true] %s66
      %69 = dma.vmem_to_hbm [thread:$0]  %s67, 128, %s2, [#allocation4]
    $region21: #{tpu_custom_call.1} parent=1 // pred_fallthru
      _
    // Predicated region
    $region22: #{tpu_custom_call.1} parent=1 // pred_check
      _
    $region23: #{tpu_custom_call.1} parent=1 // pred_check_branch
      %71 = sbr.rel (0) target = $region25
    $region24: #{tpu_custom_call.1} parent=1 // pred_region
      %72 = dma.done [#allocation4], 128
    $region25: #{tpu_custom_call.1} parent=1 // pred_fallthru
      _
    %73 = vsyncpa [#allocation3], 1
    %74 = vsyncpa [#allocation6], 1
    %75 = vsyncpa [#allocation4], 1

</llo_original>
